<compile_context>
chip_gen: v7x
topology: tpu7x:2x2x1
jax: 0.10.0
libtpu: 0.0.40
codegen_flags: <defaults>
</compile_context>

<pallas_src>
import math

import jax
import jax.numpy as jnp
from jax import lax
from jax.experimental import pallas as pl

# ---------------- config ----------------
B = 2            # batch
L = 8            # sequence length
H = 32           # hidden_size
NH = 4           # num_attention_heads
D = H // NH      # attention_head_size
I = 64           # intermediate_size
T = B * L        # flattened token count
LN_EPS = 1e-12
NEG_INF = -1e30  # large finite negative (avoids inf-inf / 0/0 NaN paths)


def _layer_norm(x, gamma, beta):
    mu = jnp.mean(x, axis=-1, keepdims=True)
    var = jnp.mean((x - mu) ** 2, axis=-1, keepdims=True)
    return (x - mu) * lax.rsqrt(var + LN_EPS) * gamma + beta


def _gelu(x):
    return x * 0.5 * (1.0 + lax.erf(x / math.sqrt(2.0)))


def bert_layer_kernel(x_ref, mask_ref, wqkv_ref, wo_ref, wi_ref, wo2_ref,
                      bias_ref, out_ref):
    x2 = x_ref[...]                                   # (T, H) f32
    bias = bias_ref[...]                              # (8, 3H) f32 slab

    b_qkv = bias[0:1, :]                              # (1, 3H)  (Q part pre-scaled)
    bo    = bias[1:2, :H]
    g1    = bias[2:3, :H]
    be1   = bias[3:4, :H]
    bi    = bias[4:5, :I]
    bo2   = bias[5:6, :H]
    g2    = bias[6:7, :H]
    be2   = bias[7:8, :H]

    # ---- fused QKV projection: one lane-dense bf16 MXU matmul ----
    qkv = jnp.dot(x2.astype(jnp.bfloat16), wqkv_ref[...],
                  preferred_element_type=jnp.float32) + b_qkv    # (T, 3H) f32
    qkv_bf = qkv.astype(jnp.bfloat16)                 # single cast, sliced per head

    add_mask = mask_ref[...]                          # (T, T) f32 (block-diag + key mask)

    # ---- per-head attention via static lane slices (NH = 4 heads) ----
    ctx_heads = []
    for h in range(NH):
        q_h = qkv_bf[:, h * D:(h + 1) * D]            # 1/sqrt(D) folded into Wq/bq
        k_h = qkv_bf[:, H + h * D:H + (h + 1) * D]
        v_h = qkv_bf[:, 2 * H + h * D:2 * H + (h + 1) * D]

        s = jnp.einsum("qd,kd->qk", q_h, k_h,
                       preferred_element_type=jnp.float32) + add_mask   # (T, T) f32
        m = jnp.max(s, axis=-1, keepdims=True)
        p = jnp.exp(s - m)                            # f32 softmax numerics
        denom = jnp.sum(p, axis=-1, keepdims=True)
        r = pl.reciprocal(denom, approx=True)         # EUP reciprocal
        r = r * (2.0 - denom * r)                     # one Newton step -> ~f32 accuracy
        probs = p * r
        ctx_heads.append(jnp.dot(probs.astype(jnp.bfloat16), v_h,
                                 preferred_element_type=jnp.float32))   # (T, D)

    # ---- lane-concat heads, single output projection ----
    ctx = jnp.concatenate(ctx_heads, axis=-1)         # (T, H), head-major lane layout
    attn_proj = jnp.dot(ctx.astype(jnp.bfloat16), wo_ref[...],
                        preferred_element_type=jnp.float32) + bo
    attn_out = _layer_norm(attn_proj + x2, g1, be1)   # f32

    # ---- feed-forward ----
    inter = _gelu(jnp.dot(attn_out.astype(jnp.bfloat16), wi_ref[...],
                          preferred_element_type=jnp.float32) + bi)
    ffn = jnp.dot(inter.astype(jnp.bfloat16), wo2_ref[...],
                  preferred_element_type=jnp.float32) + bo2
    out_ref[...] = _layer_norm(ffn + attn_out, g2, be2)   # single (T, H) store


# ---------------- host-side one-time parameter packing ----------------
def prepare_params(params):
    inv_sqrt_d = 1.0 / math.sqrt(D)
    wq = params["wq"] * inv_sqrt_d            # fold 1/sqrt(D) into Q projection
    bq = params["bq"] * inv_sqrt_d
    w_qkv = jnp.concatenate([wq, params["wk"], params["wv"]], axis=1)   # (H, 3H)
    b_qkv = jnp.concatenate([bq, params["bk"], params["bv"]], axis=1)   # (1, 3H)

    def pad_row(v):                           # (1, n) -> (3H,)
        v = v.reshape(-1)
        return jnp.pad(v, (0, 3 * H - v.shape[0]))

    bias_slab = jnp.stack([
        b_qkv.reshape(-1),
        pad_row(params["bo"]), pad_row(params["g1"]), pad_row(params["be1"]),
        pad_row(params["bi"]),
        pad_row(params["bo2"]), pad_row(params["g2"]), pad_row(params["be2"]),
    ], axis=0).astype(jnp.float32)            # (8, 3H)

    return {
        "w_qkv": w_qkv.astype(jnp.bfloat16),
        "wo": params["wo"].astype(jnp.bfloat16),
        "wi": params["wi"].astype(jnp.bfloat16),
        "wo2": params["wo2"].astype(jnp.bfloat16),
        "bias": bias_slab,
    }


def _build_add_mask(mask):
    """(B, L) keep-mask -> (T, T) additive mask (block-diag over flattened tokens)."""
    keep = mask.reshape(T) != 0.0                                   # (T,)
    batch_of = jnp.repeat(jnp.arange(B, dtype=jnp.int32), L)        # (T,)
    same_batch = batch_of[:, None] == batch_of[None, :]
    allowed = same_batch & keep[None, :]
    return jnp.where(allowed, 0.0, NEG_INF).astype(jnp.float32)


@jax.jit
def bert_layer_pallas(x, mask, prepped):
    """x: (B, L, H) f32, mask: (B, L) f32 (1.0 keep / 0.0 mask)."""
    x2 = x.reshape(T, H)
    add_mask = _build_add_mask(mask)
    # Entire working set (<20 KB with bf16 weights) fits VMEM on every TPU
    # generation: no grid, no pipelining — one invocation, full-array VMEM blocks.
    out = pl.pallas_call(
        bert_layer_kernel,
        out_shape=jax.ShapeDtypeStruct((T, H), jnp.float32),
    )(x2, add_mask, prepped["w_qkv"], prepped["wo"], prepped["wi"],
      prepped["wo2"], prepped["bias"])
    return out.reshape(B, L, H)


# ---------------- pure-JAX reference (mirrors the PyTorch forward) ----------------
def bert_layer_ref(x, mask, p):
    q = x @ p["wq"] + p["bq"]
    k = x @ p["wk"] + p["bk"]
    v = x @ p["wv"] + p["bv"]

    def split(t):  # (B, L, H) -> (B, NH, L, D)
        return t.reshape(B, L, NH, D).transpose(0, 2, 1, 3)

    qh, kh, vh = split(q), split(k), split(v)
    scores = jnp.einsum("bhqd,bhkd->bhqk", qh, kh) / math.sqrt(D)
    add_mask = jnp.where(mask == 0.0, -jnp.inf, 0.0)[:, None, None, :]
    scores = scores + add_mask
    probs = jax.nn.softmax(scores, axis=-1)
    ctx = jnp.einsum("bhqk,bhkd->bhqd", probs, vh).transpose(0, 2, 1, 3).reshape(B, L, H)

    attn_proj = ctx @ p["wo"] + p["bo"]
    attn_out = _layer_norm(attn_proj + x, p["g1"], p["be1"])
    inter = _gelu(attn_out @ p["wi"] + p["bi"])
    ffn = inter @ p["wo2"] + p["bo2"]
    return _layer_norm(ffn + attn_out, p["g2"], p["be2"])


def init_params(key):
    ks = jax.random.split(key, 8)
    s = 0.02
    # PyTorch nn.Linear stores weight as (out, in); we store the transposed
    # (in, out) layout so y = x @ W + b directly.
    return {
        "wq": s * jax.random.normal(ks[0], (H, H), jnp.float32),
        "bq": jnp.zeros((1, H), jnp.float32),
        "wk": s * jax.random.normal(ks[1], (H, H), jnp.float32),
        "bk": jnp.zeros((1, H), jnp.float32),
        "wv": s * jax.random.normal(ks[2], (H, H), jnp.float32),
        "bv": jnp.zeros((1, H), jnp.float32),
        "wo": s * jax.random.normal(ks[3], (H, H), jnp.float32),
        "bo": jnp.zeros((1, H), jnp.float32),
        "g1": jnp.ones((1, H), jnp.float32),
        "be1": jnp.zeros((1, H), jnp.float32),
        "wi": s * jax.random.normal(ks[4], (H, I), jnp.float32),
        "bi": jnp.zeros((1, I), jnp.float32),
        "wo2": s * jax.random.normal(ks[5], (I, H), jnp.float32),
        "bo2": jnp.zeros((1, H), jnp.float32),
        "g2": jnp.ones((1, H), jnp.float32),
        "be2": jnp.zeros((1, H), jnp.float32),
    }


if __name__ == "__main__":
    key = jax.random.PRNGKey(0)
    k_x, k_p = jax.random.split(key)
    x = jax.random.normal(k_x, (B, L, H), jnp.float32)
    # mask: 1.0 = attend, 0.0 = masked; mask out last two key positions of batch 1.
    mask = jnp.ones((B, L), jnp.float32).at[1, -2:].set(0.0)
    params = init_params(k_p)
    prepped = prepare_params(params)   # one-time host-side weight packing

    out = jax.block_until_ready(bert_layer_pallas(x, mask, prepped))
    ref = bert_layer_ref(x, mask, params)

    assert out.shape == (B, L, H)
    err = float(jnp.max(jnp.abs(out - ref)))
    # Tolerance reflects bf16 matmul inputs (f32 accumulation, f32 LN/softmax).
    assert jnp.allclose(out, ref, atol=2e-3, rtol=2e-3), err
    print("KERNEL_OK")
</pallas_src>

<mosaic_0001>
module attributes {stable_mosaic.version = 11 : i64} {
  func.func @bert_layer_kernel(%arg0: memref<16x32xf32, #tpu.memory_space<vmem>>, %arg1: memref<16x16xf32, #tpu.memory_space<vmem>>, %arg2: memref<32x96xbf16, #tpu.memory_space<vmem>>, %arg3: memref<32x32xbf16, #tpu.memory_space<vmem>>, %arg4: memref<32x64xbf16, #tpu.memory_space<vmem>>, %arg5: memref<64x32xbf16, #tpu.memory_space<vmem>>, %arg6: memref<8x96xf32, #tpu.memory_space<vmem>>, %arg7: memref<16x32xf32, #tpu.memory_space<vmem>>) attributes {dimension_semantics = [], scalar_prefetch = 0 : i64, scratch_operands = 0 : i64, tpu.core_type = #tpu.core_type<tc>} {
    %c0 = arith.constant 0 : index
    %c0_0 = arith.constant 0 : index
    %0 = vector.load %arg0[%c0, %c0_0] : memref<16x32xf32, #tpu.memory_space<vmem>>, vector<16x32xf32>
    %c0_1 = arith.constant 0 : index
    %c0_2 = arith.constant 0 : index
    %1 = vector.load %arg6[%c0_1, %c0_2] : memref<8x96xf32, #tpu.memory_space<vmem>>, vector<8x96xf32>
    %2 = vector.extract_strided_slice %1 {offsets = [0, 0], sizes = [1, 96], strides = [1, 1]} : vector<8x96xf32> to vector<1x96xf32>
    %3 = vector.extract_strided_slice %1 {offsets = [1, 0], sizes = [1, 32], strides = [1, 1]} : vector<8x96xf32> to vector<1x32xf32>
    %4 = vector.extract_strided_slice %1 {offsets = [2, 0], sizes = [1, 32], strides = [1, 1]} : vector<8x96xf32> to vector<1x32xf32>
    %5 = vector.extract_strided_slice %1 {offsets = [3, 0], sizes = [1, 32], strides = [1, 1]} : vector<8x96xf32> to vector<1x32xf32>
    %6 = vector.extract_strided_slice %1 {offsets = [4, 0], sizes = [1, 64], strides = [1, 1]} : vector<8x96xf32> to vector<1x64xf32>
    %7 = vector.extract_strided_slice %1 {offsets = [5, 0], sizes = [1, 32], strides = [1, 1]} : vector<8x96xf32> to vector<1x32xf32>
    %8 = vector.extract_strided_slice %1 {offsets = [6, 0], sizes = [1, 32], strides = [1, 1]} : vector<8x96xf32> to vector<1x32xf32>
    %9 = vector.extract_strided_slice %1 {offsets = [7, 0], sizes = [1, 32], strides = [1, 1]} : vector<8x96xf32> to vector<1x32xf32>
    %10 = arith.truncf %0 : vector<16x32xf32> to vector<16x32xbf16>
    %c0_3 = arith.constant 0 : index
    %c0_4 = arith.constant 0 : index
    %11 = vector.load %arg2[%c0_3, %c0_4] : memref<32x96xbf16, #tpu.memory_space<vmem>>, vector<32x96xbf16>
    %cst = arith.constant dense<0.000000e+00> : vector<16x96xf32>
    %12 = tpu.matmul %10, %11, %cst {dimension_numbers = #tpu.dot_dimension_numbers<[1], [0], [0], [1], [0, 0, 1, 1], [], []>} : vector<16x32xbf16>, vector<32x96xbf16>, vector<16x96xf32> -> vector<16x96xf32>
    %13 = vector.broadcast %2 : vector<1x96xf32> to vector<16x96xf32>
    %14 = arith.addf %12, %13 : vector<16x96xf32>
    %15 = arith.truncf %14 : vector<16x96xf32> to vector<16x96xbf16>
    %c0_5 = arith.constant 0 : index
    %c0_6 = arith.constant 0 : index
    %16 = vector.load %arg1[%c0_5, %c0_6] : memref<16x16xf32, #tpu.memory_space<vmem>>, vector<16x16xf32>
    %17 = vector.extract_strided_slice %15 {offsets = [0, 0], sizes = [16, 8], strides = [1, 1]} : vector<16x96xbf16> to vector<16x8xbf16>
    %18 = vector.extract_strided_slice %15 {offsets = [0, 32], sizes = [16, 8], strides = [1, 1]} : vector<16x96xbf16> to vector<16x8xbf16>
    %19 = vector.extract_strided_slice %15 {offsets = [0, 64], sizes = [16, 8], strides = [1, 1]} : vector<16x96xbf16> to vector<16x8xbf16>
    "tpu.trace_start"() <{level = 10 : i32, message = "qd,kd->qk"}> : () -> ()
    %cst_7 = arith.constant dense<0.000000e+00> : vector<16x16xf32>
    %20 = tpu.matmul %17, %18, %cst_7 {dimension_numbers = #tpu.dot_dimension_numbers<[1], [1], [0], [0], [0, 0, 1, 0], [], []>} : vector<16x8xbf16>, vector<16x8xbf16>, vector<16x16xf32> -> vector<16x16xf32>
    "tpu.trace_stop"() : () -> ()
    %21 = arith.addf %20, %16 : vector<16x16xf32>
    %cst_8 = arith.constant dense<0xFF800000> : vector<16xf32>
    %22 = vector.multi_reduction <maximumf>, %21, %cst_8 [1] : vector<16x16xf32> to vector<16xf32>
    %23 = vector.shape_cast %22 : vector<16xf32> to vector<16x1xf32>
    %24 = vector.broadcast %23 : vector<16x1xf32> to vector<16x16xf32>
    %25 = arith.subf %21, %24 : vector<16x16xf32>
    %26 = math.exp %25 : vector<16x16xf32>
    %cst_9 = arith.constant dense<0.000000e+00> : vector<16xf32>
    %27 = vector.multi_reduction <add>, %26, %cst_9 [1] : vector<16x16xf32> to vector<16xf32>
    %28 = vector.shape_cast %27 : vector<16xf32> to vector<16x1xf32>
    %29 = tpu.reciprocal %28 {approx = true} : vector<16x1xf32> -> vector<16x1xf32>
    %30 = arith.mulf %28, %29 : vector<16x1xf32>
    %cst_10 = arith.constant 2.000000e+00 : f32
    %31 = vector.broadcast %cst_10 : f32 to vector<16x1xf32>
    %32 = arith.subf %31, %30 : vector<16x1xf32>
    %33 = arith.mulf %29, %32 : vector<16x1xf32>
    %34 = vector.broadcast %33 : vector<16x1xf32> to vector<16x16xf32>
    %35 = arith.mulf %26, %34 : vector<16x16xf32>
    %36 = arith.truncf %35 : vector<16x16xf32> to vector<16x16xbf16>
    %cst_11 = arith.constant dense<0.000000e+00> : vector<16x8xf32>
    %37 = tpu.matmul %36, %19, %cst_11 {dimension_numbers = #tpu.dot_dimension_numbers<[1], [0], [0], [1], [0, 0, 1, 1], [], []>} : vector<16x16xbf16>, vector<16x8xbf16>, vector<16x8xf32> -> vector<16x8xf32>
    %38 = vector.extract_strided_slice %15 {offsets = [0, 8], sizes = [16, 8], strides = [1, 1]} : vector<16x96xbf16> to vector<16x8xbf16>
    %39 = vector.extract_strided_slice %15 {offsets = [0, 40], sizes = [16, 8], strides = [1, 1]} : vector<16x96xbf16> to vector<16x8xbf16>
    %40 = vector.extract_strided_slice %15 {offsets = [0, 72], sizes = [16, 8], strides = [1, 1]} : vector<16x96xbf16> to vector<16x8xbf16>
    "tpu.trace_start"() <{level = 10 : i32, message = "qd,kd->qk"}> : () -> ()
    %cst_12 = arith.constant dense<0.000000e+00> : vector<16x16xf32>
    %41 = tpu.matmul %38, %39, %cst_12 {dimension_numbers = #tpu.dot_dimension_numbers<[1], [1], [0], [0], [0, 0, 1, 0], [], []>} : vector<16x8xbf16>, vector<16x8xbf16>, vector<16x16xf32> -> vector<16x16xf32>
    "tpu.trace_stop"() : () -> ()
    %42 = arith.addf %41, %16 : vector<16x16xf32>
    %cst_13 = arith.constant dense<0xFF800000> : vector<16xf32>
    %43 = vector.multi_reduction <maximumf>, %42, %cst_13 [1] : vector<16x16xf32> to vector<16xf32>
    %44 = vector.shape_cast %43 : vector<16xf32> to vector<16x1xf32>
    %45 = vector.broadcast %44 : vector<16x1xf32> to vector<16x16xf32>
    %46 = arith.subf %42, %45 : vector<16x16xf32>
    %47 = math.exp %46 : vector<16x16xf32>
    %cst_14 = arith.constant dense<0.000000e+00> : vector<16xf32>
    %48 = vector.multi_reduction <add>, %47, %cst_14 [1] : vector<16x16xf32> to vector<16xf32>
    %49 = vector.shape_cast %48 : vector<16xf32> to vector<16x1xf32>
    %50 = tpu.reciprocal %49 {approx = true} : vector<16x1xf32> -> vector<16x1xf32>
    %51 = arith.mulf %49, %50 : vector<16x1xf32>
    %cst_15 = arith.constant 2.000000e+00 : f32
    %52 = vector.broadcast %cst_15 : f32 to vector<16x1xf32>
    %53 = arith.subf %52, %51 : vector<16x1xf32>
    %54 = arith.mulf %50, %53 : vector<16x1xf32>
    %55 = vector.broadcast %54 : vector<16x1xf32> to vector<16x16xf32>
    %56 = arith.mulf %47, %55 : vector<16x16xf32>
    %57 = arith.truncf %56 : vector<16x16xf32> to vector<16x16xbf16>
    %cst_16 = arith.constant dense<0.000000e+00> : vector<16x8xf32>
    %58 = tpu.matmul %57, %40, %cst_16 {dimension_numbers = #tpu.dot_dimension_numbers<[1], [0], [0], [1], [0, 0, 1, 1], [], []>} : vector<16x16xbf16>, vector<16x8xbf16>, vector<16x8xf32> -> vector<16x8xf32>
    %59 = vector.extract_strided_slice %15 {offsets = [0, 16], sizes = [16, 8], strides = [1, 1]} : vector<16x96xbf16> to vector<16x8xbf16>
    %60 = vector.extract_strided_slice %15 {offsets = [0, 48], sizes = [16, 8], strides = [1, 1]} : vector<16x96xbf16> to vector<16x8xbf16>
    %61 = vector.extract_strided_slice %15 {offsets = [0, 80], sizes = [16, 8], strides = [1, 1]} : vector<16x96xbf16> to vector<16x8xbf16>
    "tpu.trace_start"() <{level = 10 : i32, message = "qd,kd->qk"}> : () -> ()
    %cst_17 = arith.constant dense<0.000000e+00> : vector<16x16xf32>
    %62 = tpu.matmul %59, %60, %cst_17 {dimension_numbers = #tpu.dot_dimension_numbers<[1], [1], [0], [0], [0, 0, 1, 0], [], []>} : vector<16x8xbf16>, vector<16x8xbf16>, vector<16x16xf32> -> vector<16x16xf32>
    "tpu.trace_stop"() : () -> ()
    %63 = arith.addf %62, %16 : vector<16x16xf32>
    %cst_18 = arith.constant dense<0xFF800000> : vector<16xf32>
    %64 = vector.multi_reduction <maximumf>, %63, %cst_18 [1] : vector<16x16xf32> to vector<16xf32>
    %65 = vector.shape_cast %64 : vector<16xf32> to vector<16x1xf32>
    %66 = vector.broadcast %65 : vector<16x1xf32> to vector<16x16xf32>
    %67 = arith.subf %63, %66 : vector<16x16xf32>
    %68 = math.exp %67 : vector<16x16xf32>
    %cst_19 = arith.constant dense<0.000000e+00> : vector<16xf32>
    %69 = vector.multi_reduction <add>, %68, %cst_19 [1] : vector<16x16xf32> to vector<16xf32>
    %70 = vector.shape_cast %69 : vector<16xf32> to vector<16x1xf32>
    %71 = tpu.reciprocal %70 {approx = true} : vector<16x1xf32> -> vector<16x1xf32>
    %72 = arith.mulf %70, %71 : vector<16x1xf32>
    %cst_20 = arith.constant 2.000000e+00 : f32
    %73 = vector.broadcast %cst_20 : f32 to vector<16x1xf32>
    %74 = arith.subf %73, %72 : vector<16x1xf32>
    %75 = arith.mulf %71, %74 : vector<16x1xf32>
    %76 = vector.broadcast %75 : vector<16x1xf32> to vector<16x16xf32>
    %77 = arith.mulf %68, %76 : vector<16x16xf32>
    %78 = arith.truncf %77 : vector<16x16xf32> to vector<16x16xbf16>
    %cst_21 = arith.constant dense<0.000000e+00> : vector<16x8xf32>
    %79 = tpu.matmul %78, %61, %cst_21 {dimension_numbers = #tpu.dot_dimension_numbers<[1], [0], [0], [1], [0, 0, 1, 1], [], []>} : vector<16x16xbf16>, vector<16x8xbf16>, vector<16x8xf32> -> vector<16x8xf32>
    %80 = vector.extract_strided_slice %15 {offsets = [0, 24], sizes = [16, 8], strides = [1, 1]} : vector<16x96xbf16> to vector<16x8xbf16>
    %81 = vector.extract_strided_slice %15 {offsets = [0, 56], sizes = [16, 8], strides = [1, 1]} : vector<16x96xbf16> to vector<16x8xbf16>
    %82 = vector.extract_strided_slice %15 {offsets = [0, 88], sizes = [16, 8], strides = [1, 1]} : vector<16x96xbf16> to vector<16x8xbf16>
    "tpu.trace_start"() <{level = 10 : i32, message = "qd,kd->qk"}> : () -> ()
    %cst_22 = arith.constant dense<0.000000e+00> : vector<16x16xf32>
    %83 = tpu.matmul %80, %81, %cst_22 {dimension_numbers = #tpu.dot_dimension_numbers<[1], [1], [0], [0], [0, 0, 1, 0], [], []>} : vector<16x8xbf16>, vector<16x8xbf16>, vector<16x16xf32> -> vector<16x16xf32>
    "tpu.trace_stop"() : () -> ()
    %84 = arith.addf %83, %16 : vector<16x16xf32>
    %cst_23 = arith.constant dense<0xFF800000> : vector<16xf32>
    %85 = vector.multi_reduction <maximumf>, %84, %cst_23 [1] : vector<16x16xf32> to vector<16xf32>
    %86 = vector.shape_cast %85 : vector<16xf32> to vector<16x1xf32>
    %87 = vector.broadcast %86 : vector<16x1xf32> to vector<16x16xf32>
    %88 = arith.subf %84, %87 : vector<16x16xf32>
    %89 = math.exp %88 : vector<16x16xf32>
    %cst_24 = arith.constant dense<0.000000e+00> : vector<16xf32>
    %90 = vector.multi_reduction <add>, %89, %cst_24 [1] : vector<16x16xf32> to vector<16xf32>
    %91 = vector.shape_cast %90 : vector<16xf32> to vector<16x1xf32>
    %92 = tpu.reciprocal %91 {approx = true} : vector<16x1xf32> -> vector<16x1xf32>
    %93 = arith.mulf %91, %92 : vector<16x1xf32>
    %cst_25 = arith.constant 2.000000e+00 : f32
    %94 = vector.broadcast %cst_25 : f32 to vector<16x1xf32>
    %95 = arith.subf %94, %93 : vector<16x1xf32>
    %96 = arith.mulf %92, %95 : vector<16x1xf32>
    %97 = vector.broadcast %96 : vector<16x1xf32> to vector<16x16xf32>
    %98 = arith.mulf %89, %97 : vector<16x16xf32>
    %99 = arith.truncf %98 : vector<16x16xf32> to vector<16x16xbf16>
    %cst_26 = arith.constant dense<0.000000e+00> : vector<16x8xf32>
    %100 = tpu.matmul %99, %82, %cst_26 {dimension_numbers = #tpu.dot_dimension_numbers<[1], [0], [0], [1], [0, 0, 1, 1], [], []>} : vector<16x16xbf16>, vector<16x8xbf16>, vector<16x8xf32> -> vector<16x8xf32>
    %101 = tpu.concatenate %37, %58, %79, %100 in 1 : vector<16x8xf32>, vector<16x8xf32>, vector<16x8xf32>, vector<16x8xf32> -> vector<16x32xf32>
    %102 = arith.truncf %101 : vector<16x32xf32> to vector<16x32xbf16>
    %c0_27 = arith.constant 0 : index
    %c0_28 = arith.constant 0 : index
    %103 = vector.load %arg3[%c0_27, %c0_28] : memref<32x32xbf16, #tpu.memory_space<vmem>>, vector<32x32xbf16>
    %cst_29 = arith.constant dense<0.000000e+00> : vector<16x32xf32>
    %104 = tpu.matmul %102, %103, %cst_29 {dimension_numbers = #tpu.dot_dimension_numbers<[1], [0], [0], [1], [0, 0, 1, 1], [], []>} : vector<16x32xbf16>, vector<32x32xbf16>, vector<16x32xf32> -> vector<16x32xf32>
    %105 = vector.broadcast %3 : vector<1x32xf32> to vector<16x32xf32>
    %106 = arith.addf %104, %105 : vector<16x32xf32>
    %107 = arith.addf %106, %0 : vector<16x32xf32>
    %cst_30 = arith.constant dense<0.000000e+00> : vector<16xf32>
    %108 = vector.multi_reduction <add>, %107, %cst_30 [1] : vector<16x32xf32> to vector<16xf32>
    %109 = vector.shape_cast %108 : vector<16xf32> to vector<16x1xf32>
    %cst_31 = arith.constant 3.200000e+01 : f32
    %110 = vector.broadcast %cst_31 : f32 to vector<16x1xf32>
    %111 = arith.divf %109, %110 : vector<16x1xf32>
    %112 = vector.broadcast %111 : vector<16x1xf32> to vector<16x32xf32>
    %113 = arith.subf %107, %112 : vector<16x32xf32>
    %114 = arith.mulf %113, %113 : vector<16x32xf32>
    %cst_32 = arith.constant dense<0.000000e+00> : vector<16xf32>
    %115 = vector.multi_reduction <add>, %114, %cst_32 [1] : vector<16x32xf32> to vector<16xf32>
    %116 = vector.shape_cast %115 : vector<16xf32> to vector<16x1xf32>
    %cst_33 = arith.constant 3.200000e+01 : f32
    %117 = vector.broadcast %cst_33 : f32 to vector<16x1xf32>
    %118 = arith.divf %116, %117 : vector<16x1xf32>
    %119 = vector.broadcast %111 : vector<16x1xf32> to vector<16x32xf32>
    %120 = arith.subf %107, %119 : vector<16x32xf32>
    %cst_34 = arith.constant 9.99999996E-13 : f32
    %121 = vector.broadcast %cst_34 : f32 to vector<16x1xf32>
    %122 = arith.addf %118, %121 : vector<16x1xf32>
    %123 = math.rsqrt %122 : vector<16x1xf32>
    %124 = vector.broadcast %123 : vector<16x1xf32> to vector<16x32xf32>
    %125 = arith.mulf %120, %124 : vector<16x32xf32>
    %126 = vector.broadcast %4 : vector<1x32xf32> to vector<16x32xf32>
    %127 = arith.mulf %125, %126 : vector<16x32xf32>
    %128 = vector.broadcast %5 : vector<1x32xf32> to vector<16x32xf32>
    %129 = arith.addf %127, %128 : vector<16x32xf32>
    %130 = arith.truncf %129 : vector<16x32xf32> to vector<16x32xbf16>
    %c0_35 = arith.constant 0 : index
    %c0_36 = arith.constant 0 : index
    %131 = vector.load %arg4[%c0_35, %c0_36] : memref<32x64xbf16, #tpu.memory_space<vmem>>, vector<32x64xbf16>
    %cst_37 = arith.constant dense<0.000000e+00> : vector<16x64xf32>
    %132 = tpu.matmul %130, %131, %cst_37 {dimension_numbers = #tpu.dot_dimension_numbers<[1], [0], [0], [1], [0, 0, 1, 1], [], []>} : vector<16x32xbf16>, vector<32x64xbf16>, vector<16x64xf32> -> vector<16x64xf32>
    %133 = vector.broadcast %6 : vector<1x64xf32> to vector<16x64xf32>
    %134 = arith.addf %132, %133 : vector<16x64xf32>
    %cst_38 = arith.constant 5.000000e-01 : f32
    %135 = vector.broadcast %cst_38 : f32 to vector<16x64xf32>
    %136 = arith.mulf %134, %135 : vector<16x64xf32>
    %cst_39 = arith.constant 1.41421354 : f32
    %137 = vector.broadcast %cst_39 : f32 to vector<16x64xf32>
    %138 = arith.divf %134, %137 : vector<16x64xf32>
    %139 = math.erf %138 : vector<16x64xf32>
    %cst_40 = arith.constant 1.000000e+00 : f32
    %140 = vector.broadcast %cst_40 : f32 to vector<16x64xf32>
    %141 = arith.addf %140, %139 : vector<16x64xf32>
    %142 = arith.mulf %136, %141 : vector<16x64xf32>
    %143 = arith.truncf %142 : vector<16x64xf32> to vector<16x64xbf16>
    %c0_41 = arith.constant 0 : index
    %c0_42 = arith.constant 0 : index
    %144 = vector.load %arg5[%c0_41, %c0_42] : memref<64x32xbf16, #tpu.memory_space<vmem>>, vector<64x32xbf16>
    %cst_43 = arith.constant dense<0.000000e+00> : vector<16x32xf32>
    %145 = tpu.matmul %143, %144, %cst_43 {dimension_numbers = #tpu.dot_dimension_numbers<[1], [0], [0], [1], [0, 0, 1, 1], [], []>} : vector<16x64xbf16>, vector<64x32xbf16>, vector<16x32xf32> -> vector<16x32xf32>
    %146 = vector.broadcast %7 : vector<1x32xf32> to vector<16x32xf32>
    %147 = arith.addf %145, %146 : vector<16x32xf32>
    %148 = arith.addf %147, %129 : vector<16x32xf32>
    %cst_44 = arith.constant dense<0.000000e+00> : vector<16xf32>
    %149 = vector.multi_reduction <add>, %148, %cst_44 [1] : vector<16x32xf32> to vector<16xf32>
    %150 = vector.shape_cast %149 : vector<16xf32> to vector<16x1xf32>
    %cst_45 = arith.constant 3.200000e+01 : f32
    %151 = vector.broadcast %cst_45 : f32 to vector<16x1xf32>
    %152 = arith.divf %150, %151 : vector<16x1xf32>
    %153 = vector.broadcast %152 : vector<16x1xf32> to vector<16x32xf32>
    %154 = arith.subf %148, %153 : vector<16x32xf32>
    %155 = arith.mulf %154, %154 : vector<16x32xf32>
    %cst_46 = arith.constant dense<0.000000e+00> : vector<16xf32>
    %156 = vector.multi_reduction <add>, %155, %cst_46 [1] : vector<16x32xf32> to vector<16xf32>
    %157 = vector.shape_cast %156 : vector<16xf32> to vector<16x1xf32>
    %cst_47 = arith.constant 3.200000e+01 : f32
    %158 = vector.broadcast %cst_47 : f32 to vector<16x1xf32>
    %159 = arith.divf %157, %158 : vector<16x1xf32>
    %160 = vector.broadcast %152 : vector<16x1xf32> to vector<16x32xf32>
    %161 = arith.subf %148, %160 : vector<16x32xf32>
    %cst_48 = arith.constant 9.99999996E-13 : f32
    %162 = vector.broadcast %cst_48 : f32 to vector<16x1xf32>
    %163 = arith.addf %159, %162 : vector<16x1xf32>
    %164 = math.rsqrt %163 : vector<16x1xf32>
    %165 = vector.broadcast %164 : vector<16x1xf32> to vector<16x32xf32>
    %166 = arith.mulf %161, %165 : vector<16x32xf32>
    %167 = vector.broadcast %8 : vector<1x32xf32> to vector<16x32xf32>
    %168 = arith.mulf %166, %167 : vector<16x32xf32>
    %169 = vector.broadcast %9 : vector<1x32xf32> to vector<16x32xf32>
    %170 = arith.addf %168, %169 : vector<16x32xf32>
    %c0_49 = arith.constant 0 : index
    %c0_50 = arith.constant 0 : index
    %171 = vector.load %arg7[%c0_49, %c0_50] : memref<16x32xf32, #tpu.memory_space<vmem>>, vector<16x32xf32>
    tpu.vector_store %arg7[%c0_49, %c0_50], %170 {strides = array<i32>} : memref<16x32xf32, #tpu.memory_space<vmem>>, vector<16x32xf32>,
    return
  }
}

</mosaic_0001>

<llo_original>
// kernel: eq.8
$region0: #{eq.8}
  %s0 = inlined_call_operand.vmem [shape: s32[2,8], index: 0, kind: input, shape index: {}]
  %s1 = inlined_call_operand.vmem [shape: s32[16], index: 1, kind: output, shape index: {}]
  $region1: #{eq.8} parent=0
    #allocation0 [shape = 'u8[4096]{0}', space=vmem, size = 0x1000, scoped, tag = 'scoped mem for output reshape']
    #allocation1 [shape = 'u8[4096]{0}', space=vmem, size = 0x1000, scoped, tag = 'scoped mem for input reshape']
    %s3 = sshllo.u32 0, 2
    %v4 = vld [vmem:[%s0] sm:%s3]
    %5 = vst [vmem:[#allocation1] sm:%s3] %v4
    %v6 = vld [vmem:[#allocation1] sm:$0x1]
    %vm7 = vcmask 64512
    %8 = vst.msk [vmem:[#allocation0] sm:$0x1] %vm7, %v6
    %s9 = scalar_lea.vmem [#allocation1], 1
    %v10 = vld [vmem:[%s9] sm:$0x1]
    %11 = vrot.lane.b32.xlu0 %v10, 8
    %v12 = vpop.permute.xlu0 %11
    %vm13 = vcmask 130112
    %14 = vst.msk [vmem:[#allocation0] sm:$0x1] %vm13, %v12
    %s16 = sshllo.u32 0, 1
    %v18 = vld [vmem:[#allocation0] sm:%s16]
    %s19 = sshllo.u32 0, 1
    %20 = vst [vmem:[%s1] sm:%s19] %v18

// kernel: bert_layer_pallas.1
$region0: #{bert_layer_pallas.1}
  #allocation0 [shape = 'u32[]', space=smem, size = 0x4, offset = 0x4, fixed_abs, tag = 'smem constant byte address 0x4 - core index']
  #allocation1 [shape = 'u32[144,128]{1,0:T(1,128)}', space=vmem, size = 0x12000, scoped, tag = 'internal scratch']
  %s0 = inlined_call_operand.vmem [shape: f32[16,32], index: 0, kind: input, shape index: {}]
  %s1 = inlined_call_operand.vmem [shape: f32[16,16], index: 1, kind: input, shape index: {}]
  %s2 = inlined_call_operand.vmem [shape: bf16[32,96], index: 2, kind: input, shape index: {}]
  %s3 = inlined_call_operand.vmem [shape: bf16[32,32], index: 3, kind: input, shape index: {}]
  %s4 = inlined_call_operand.vmem [shape: bf16[32,64], index: 4, kind: input, shape index: {}]
  %s5 = inlined_call_operand.vmem [shape: bf16[64,32], index: 5, kind: input, shape index: {}]
  %s6 = inlined_call_operand.vmem [shape: f32[8,96], index: 6, kind: input, shape index: {}]
  %s7 = inlined_call_operand.hbm [shape: f32[16,32], index: 7, kind: output, shape index: {}]
  %s8 = sld [smem:[#allocation0]]
  $region38: #{bert_layer_pallas.1} parent=0
    _
  %s10 = ssub.s32 1, %s8
  %s11 = scalar_select 0, %s10, %s8
  $region1: #{bert_layer_pallas.1} parent=0
    #allocation2 [shape = 'u8[8192]{0}', space=vmem, size = 0x2000, scoped, tag = 'output window, operand 0, single buffered']
    #allocation3 [shape = 's32[1]{0}', space=sflag, size = 0x4, scoped, tag = 'scoped memory for bert_layer_pallas.1']
    %12 = vsyncpa [#allocation3], 0
    // Predicated region
    $region2: #{bert_layer_pallas.1} parent=1 // pred_check
      _
    $region3: #{bert_layer_pallas.1} parent=1 // pred_check_branch
      %14 = sbr.rel (0) target = $region5
    $region4: #{bert_layer_pallas.1} parent=1 // pred_region
      _
    $region5: #{bert_layer_pallas.1} parent=1 // pred_fallthru
      _
    // Predicated region
    $region6: #{bert_layer_pallas.1} parent=1 // pred_check
      _
    $region7: #{bert_layer_pallas.1} parent=1 // pred_check_branch
      %16 = sbr.rel (0) target = $region9
    $region8: #{bert_layer_pallas.1} parent=1 // pred_region
      _
    $region9: #{bert_layer_pallas.1} parent=1 // pred_fallthru
      _
    // Predicated region
    $region10: #{bert_layer_pallas.1} parent=1 // pred_check
      _
    $region11: #{bert_layer_pallas.1} parent=1 // pred_check_branch
      %18 = sbr.rel (0) target = $region13
    $region12: #{bert_layer_pallas.1} parent=1 // pred_region
      _
    $region13: #{bert_layer_pallas.1} parent=1 // pred_fallthru
      _
    // Predicated region
    $region14: #{bert_layer_pallas.1} parent=1 // pred_check
      _
    $region15: #{bert_layer_pallas.1} parent=1 // pred_check_branch
      %20 = sbr.rel (0) target = $region17
    $region16: #{bert_layer_pallas.1} parent=1 // pred_region
      _
    $region17: #{bert_layer_pallas.1} parent=1 // pred_fallthru
      _
    // Predicated region
    $region18: #{bert_layer_pallas.1} parent=1 // pred_check
      _
    $region19: #{bert_layer_pallas.1} parent=1 // pred_check_branch
      %22 = sbr.rel (0) target = $region21
    $region20: #{bert_layer_pallas.1} parent=1 // pred_region
      _
    $region21: #{bert_layer_pallas.1} parent=1 // pred_fallthru
      _
    // Predicated region
    $region22: #{bert_layer_pallas.1} parent=1 // pred_check
      _
    $region23: #{bert_layer_pallas.1} parent=1 // pred_check_branch
      %24 = sbr.rel (0) target = $region25
    $region24: #{bert_layer_pallas.1} parent=1 // pred_region
      _
    $region25: #{bert_layer_pallas.1} parent=1 // pred_fallthru
      _
    // Predicated region
    $region26: #{bert_layer_pallas.1} parent=1 // pred_check
      _
    $region27: #{bert_layer_pallas.1} parent=1 // pred_check_branch
      %26 = sbr.rel (0) target = $region29
    $region28: #{bert_layer_pallas.1} parent=1 // pred_region
      _
    $region29: #{bert_layer_pallas.1} parent=1 // pred_fallthru
      _
    %v28 = vld [vmem:[%s0] sm:$0xff]
    %v29 = vld [vmem:[%s0 + $0x8] sm:$0xff]
    %v30 = vld [vmem:[%s6] sm:$0xff]
    %v31 = vpack.c.bf16 %v29, %v28
    %v32 = vld [vmem:[%s2] sm:$0xf]
    %v33 = vld [vmem:[%s2 + $0x4] sm:$0xf]
    %v34 = vld [vmem:[%s2 + $0x8] sm:$0xf]
    %v35 = vld [vmem:[%s2 + $0xc] sm:$0xf]
    %v36 = vlaneseq
    %v37 = vshrl.u32 %v36, 7
    %v38 = vsub.s32 0, %v37
    %v39 = vrot.slane %v30, %v38
    %v44 = vunpack.c.l.b16 %v32
    %v45 = vunpack.c.l.b16 %v33
    %v46 = vunpack.c.l.b16 %v34
    %v47 = vunpack.c.l.b16 %v35
    %v48 = vpack.c.b16 %v45, %v44
    %v49 = vpack.c.b16 %v47, %v46
    %vm52 = vcmask 261120
    %v54 = vsel %vm52, %v31, 0
    %56 = vmatprep.subr.bf16.mxu0 0
    %57 = vmatpush1.bf16.msra.mxu0 %v48
    %58 = vmatprep.subr.bf16.mxu0 0
    %59 = vmatpush1.bf16.msra.mxu0 %v49
    %60 = vmatprep.subr.bf16.mxu0 0
    %61 = vmatpush1.bf16.msra.mxu0 0
    %62 = vmatprep.subr.bf16.mxu0 0
    %63 = vmatpush1.bf16.msra.mxu0 0
    %64 = vmatprep.subr.bf16.mxu0 0
    %65 = vmatpush1.bf16.msra.mxu0 0
    %66 = vmatprep.subr.bf16.mxu0 0
    %67 = vmatpush1.bf16.msra.mxu0 0
    %68 = vmatprep.subr.bf16.mxu0 0
    %69 = vmatpush1.bf16.msra.mxu0 0
    %70 = vmatprep.subr.bf16.mxu0 0
    %71 = vmatpush1.bf16.msra.mxu0 0
    %72 = vmatprep.subr.bf16.mxu0 0
    %73 = vmatpush1.bf16.msra.mxu0 0
    %74 = vmatprep.subr.bf16.mxu0 0
    %75 = vmatpush1.bf16.msra.mxu0 0
    %76 = vmatprep.subr.bf16.mxu0 0
    %77 = vmatpush1.bf16.msra.mxu0 0
    %78 = vmatprep.subr.bf16.mxu0 0
    %79 = vmatpush1.bf16.msra.mxu0 0
    %80 = vmatprep.subr.bf16.mxu0 0
    %81 = vmatpush1.bf16.msra.mxu0 0
    %82 = vmatprep.subr.bf16.mxu0 0
    %83 = vmatpush1.bf16.msra.mxu0 0
    %84 = vmatprep.subr.bf16.mxu0 0
    %85 = vmatpush1.bf16.msra.mxu0 0
    %86 = vmatprep.subr.bf16.mxu0 0
    %87 = vmatpush1.bf16.msra.mxu0 0
    %88 = vmatprep.mubr.bf16.mxu0 0
    %89 = vmatmul.mubr.bf16.gmra.mrb[0].mxu0 %v54
    %v90 = vpop.f32.mrb[0].mxu0
    %v91 = vadd.f32 %v39, %v90
    %v92 = vpop.f32.mrb[0].mxu0
    %v93 = vpop.f32.mrb[0].mxu0
    %v94 = vadd.f32 %v39, %v93
    %v95 = vpop.f32.mrb[0].mxu0
    %96 = vdwg.mxu0
    %v97 = vpack.c.bf16 %v94, %v91
    %v98 = vld [vmem:[%s1] sm:$0xff]
    %v99 = vld [vmem:[%s1 + $0x8] sm:$0xff]
    %101 = vrot.lane.b32.xlu0 %v97, 96
    %v102 = vpop.permute.xlu0 %101
    %vm103 = vcmask 64512
    %v105 = vsel %vm103, %v97, 0
    %v108 = vsel %vm103, %v102, 0
    %110 = vmatprep.subr.bf16.mxu0 0
    %111 = vmatpush1.bf16.xpose.msra.mxu0 %v108
    %112 = vmatprep.subr.bf16.mxu0 0
    %113 = vmatpush1.bf16.xpose.msra.mxu0 0
    %114 = vmatprep.subr.bf16.mxu0 0
    %115 = vmatpush1.bf16.xpose.msra.mxu0 0
    %116 = vmatprep.subr.bf16.mxu0 0
    %117 = vmatpush1.bf16.xpose.msra.mxu0 0
    %118 = vmatprep.subr.bf16.mxu0 0
    %119 = vmatpush1.bf16.xpose.msra.mxu0 0
    %120 = vmatprep.subr.bf16.mxu0 0
    %121 = vmatpush1.bf16.xpose.msra.mxu0 0
    %122 = vmatprep.subr.bf16.mxu0 0
    %123 = vmatpush1.bf16.xpose.msra.mxu0 0
    %124 = vmatprep.subr.bf16.mxu0 0
    %125 = vmatpush1.bf16.xpose.msra.mxu0 0
    %126 = vmatprep.subr.bf16.mxu0 0
    %127 = vmatpush1.bf16.xpose.msra.mxu0 0
    %128 = vmatprep.subr.bf16.mxu0 0
    %129 = vmatpush1.bf16.xpose.msra.mxu0 0
    %130 = vmatprep.subr.bf16.mxu0 0
    %131 = vmatpush1.bf16.xpose.msra.mxu0 0
    %132 = vmatprep.subr.bf16.mxu0 0
    %133 = vmatpush1.bf16.xpose.msra.mxu0 0
    %134 = vmatprep.subr.bf16.mxu0 0
    %135 = vmatpush1.bf16.xpose.msra.mxu0 0
    %136 = vmatprep.subr.bf16.mxu0 0
    %137 = vmatpush1.bf16.xpose.msra.mxu0 0
    %138 = vmatprep.subr.bf16.mxu0 0
    %139 = vmatpush1.bf16.xpose.msra.mxu0 0
    %140 = vmatprep.subr.bf16.mxu0 0
    %141 = vmatpush1.bf16.xpose.msra.mxu0 0
    %142 = vmatprep.mubr.bf16.mxu0 0
    %143 = vmatmul.mubr.bf16.gmra.mrb[0].mxu0 %v105
    %v144 = vpop.f32.mrb[0].mxu0
    %v145 = vadd.f32 %v98, %v144
    %v146 = vpop.f32.mrb[0].mxu0
    %v147 = vpop.f32.mrb[0].mxu0
    %v148 = vadd.f32 %v99, %v147
    %v149 = vpop.f32.mrb[0].mxu0
    %150 = vdwg.mxu0
    %vm151 = vcmask 130048
    %v152 = vsel %vm151, %v145, -inf
    %153 = vmax.xlane.f32.xlu0 %v152
    %v154 = vpop.xlane.xlu0 %153
    %v155 = vsel %vm151, %v148, -inf
    %156 = vmax.xlane.f32.xlu0 %v155
    %v157 = vpop.xlane.xlu0 %156
    %v158 = vsub.f32 %v145, %v154
    %v159 = vsub.f32 %v148, %v157
    %v160 = vmul.f32 %v158, 1.442695
    %v161 = vpow.pop %v160
    %v162 = vmul.f32 %v159, 1.442695
    %v163 = vpow.pop %v162
    %v164 = vsel %vm151, %v161, 0.0
    %165 = vadd.xlane.f32.xlu0 %v164
    %v166 = vpop.xlane.xlu0 %165
    %v167 = vsel %vm151, %v163, 0.0
    %168 = vadd.xlane.f32.xlu0 %v167
    %v169 = vpop.xlane.xlu0 %168
    %v170 = vrcp.pop %v166
    %v171 = vrcp.pop %v169
    %v172 = vmul.f32 %v166, %v170
    %v173 = vmul.f32 %v169, %v171
    %v174 = vsub.f32 2.0, %v172
    %v175 = vsub.f32 2.0, %v173
    %v176 = vmul.f32 %v170, %v174
    %v177 = vmul.f32 %v171, %v175
    %v178 = vmul.f32 %v161, %v176
    %v179 = vmul.f32 %v163, %v177
    %v180 = vpack.c.bf16 %v179, %v178
    %181 = vrot.lane.b32.xlu0 %v97, 64
    %v182 = vpop.permute.xlu0 %181
    %v185 = vsel %vm151, %v180, 0
    %187 = vmatprep.subr.bf16.mxu0 0
    %188 = vmatpush1.bf16.msra.mxu0 %v182
    %189 = vmatprep.subr.bf16.mxu0 0
    %190 = vmatpush1.bf16.msra.mxu0 0
    %191 = vmatprep.subr.bf16.mxu0 0
    %192 = vmatpush1.bf16.msra.mxu0 0
    %193 = vmatprep.subr.bf16.mxu0 0
    %194 = vmatpush1.bf16.msra.mxu0 0
    %195 = vmatprep.subr.bf16.mxu0 0
    %196 = vmatpush1.bf16.msra.mxu0 0
    %197 = vmatprep.subr.bf16.mxu0 0
    %198 = vmatpush1.bf16.msra.mxu0 0
    %199 = vmatprep.subr.bf16.mxu0 0
    %200 = vmatpush1.bf16.msra.mxu0 0
    %201 = vmatprep.subr.bf16.mxu0 0
    %202 = vmatpush1.bf16.msra.mxu0 0
    %203 = vmatprep.subr.bf16.mxu0 0
    %204 = vmatpush1.bf16.msra.mxu0 0
    %205 = vmatprep.subr.bf16.mxu0 0
    %206 = vmatpush1.bf16.msra.mxu0 0
    %207 = vmatprep.subr.bf16.mxu0 0
    %208 = vmatpush1.bf16.msra.mxu0 0
    %209 = vmatprep.subr.bf16.mxu0 0
    %210 = vmatpush1.bf16.msra.mxu0 0
    %211 = vmatprep.subr.bf16.mxu0 0
    %212 = vmatpush1.bf16.msra.mxu0 0
    %213 = vmatprep.subr.bf16.mxu0 0
    %214 = vmatpush1.bf16.msra.mxu0 0
    %215 = vmatprep.subr.bf16.mxu0 0
    %216 = vmatpush1.bf16.msra.mxu0 0
    %217 = vmatprep.subr.bf16.mxu0 0
    %218 = vmatpush1.bf16.msra.mxu0 0
    %219 = vmatprep.mubr.bf16.mxu0 0
    %220 = vmatmul.mubr.bf16.gmra.mrb[0].mxu0 %v185
    %v221 = vpop.f32.mrb[0].mxu0
    %v222 = vadd.f32 0.0, %v221
    %v223 = vpop.f32.mrb[0].mxu0
    %v224 = vpop.f32.mrb[0].mxu0
    %v225 = vadd.f32 0.0, %v224
    %v226 = vpop.f32.mrb[0].mxu0
    %227 = vdwg.mxu0
    %228 = vrot.lane.b32.xlu0 %v97, 120
    %v229 = vpop.permute.xlu0 %228
    %230 = vrot.lane.b32.xlu0 %v97, 88
    %v231 = vpop.permute.xlu0 %230
    %v233 = vsel %vm103, %v229, 0
    %v236 = vsel %vm103, %v231, 0
    %238 = vmatprep.subr.bf16.mxu0 0
    %239 = vmatpush1.bf16.xpose.msra.mxu0 %v236
    %240 = vmatprep.subr.bf16.mxu0 0
    %241 = vmatpush1.bf16.xpose.msra.mxu0 0
    %242 = vmatprep.subr.bf16.mxu0 0
    %243 = vmatpush1.bf16.xpose.msra.mxu0 0
    %244 = vmatprep.subr.bf16.mxu0 0
    %245 = vmatpush1.bf16.xpose.msra.mxu0 0
    %246 = vmatprep.subr.bf16.mxu0 0
    %247 = vmatpush1.bf16.xpose.msra.mxu0 0
    %248 = vmatprep.subr.bf16.mxu0 0
    %249 = vmatpush1.bf16.xpose.msra.mxu0 0
    %250 = vmatprep.subr.bf16.mxu0 0
    %251 = vmatpush1.bf16.xpose.msra.mxu0 0
    %252 = vmatprep.subr.bf16.mxu0 0
    %253 = vmatpush1.bf16.xpose.msra.mxu0 0
    %254 = vmatprep.subr.bf16.mxu0 0
    %255 = vmatpush1.bf16.xpose.msra.mxu0 0
    %256 = vmatprep.subr.bf16.mxu0 0
    %257 = vmatpush1.bf16.xpose.msra.mxu0 0
    %258 = vmatprep.subr.bf16.mxu0 0
    %259 = vmatpush1.bf16.xpose.msra.mxu0 0
    %260 = vmatprep.subr.bf16.mxu0 0
    %261 = vmatpush1.bf16.xpose.msra.mxu0 0
    %262 = vmatprep.subr.bf16.mxu0 0
    %263 = vmatpush1.bf16.xpose.msra.mxu0 0
    %264 = vmatprep.subr.bf16.mxu0 0
    %265 = vmatpush1.bf16.xpose.msra.mxu0 0
    %266 = vmatprep.subr.bf16.mxu0 0
    %267 = vmatpush1.bf16.xpose.msra.mxu0 0
    %268 = vmatprep.subr.bf16.mxu0 0
    %269 = vmatpush1.bf16.xpose.msra.mxu0 0
    %270 = vmatprep.mubr.bf16.mxu0 0
    %271 = vmatmul.mubr.bf16.gmra.mrb[0].mxu0 %v233
    %v272 = vpop.f32.mrb[0].mxu0
    %v273 = vadd.f32 %v98, %v272
    %v274 = vpop.f32.mrb[0].mxu0
    %v275 = vpop.f32.mrb[0].mxu0
    %v276 = vadd.f32 %v99, %v275
    %v277 = vpop.f32.mrb[0].mxu0
    %278 = vdwg.mxu0
    %v279 = vsel %vm151, %v273, -inf
    %280 = vmax.xlane.f32.xlu0 %v279
    %v281 = vpop.xlane.xlu0 %280
    %v282 = vsel %vm151, %v276, -inf
    %283 = vmax.xlane.f32.xlu0 %v282
    %v284 = vpop.xlane.xlu0 %283
    %v285 = vsub.f32 %v273, %v281
    %v286 = vsub.f32 %v276, %v284
    %v287 = vmul.f32 %v285, 1.442695
    %v288 = vpow.pop %v287
    %v289 = vmul.f32 %v286, 1.442695
    %v290 = vpow.pop %v289
    %v291 = vsel %vm151, %v288, 0.0
    %292 = vadd.xlane.f32.xlu0 %v291
    %v293 = vpop.xlane.xlu0 %292
    %v294 = vsel %vm151, %v290, 0.0
    %295 = vadd.xlane.f32.xlu0 %v294
    %v296 = vpop.xlane.xlu0 %295
    %v297 = vrcp.pop %v293
    %v298 = vrcp.pop %v296
    %v299 = vmul.f32 %v293, %v297
    %v300 = vmul.f32 %v296, %v298
    %v301 = vsub.f32 2.0, %v299
    %v302 = vsub.f32 2.0, %v300
    %v303 = vmul.f32 %v297, %v301
    %v304 = vmul.f32 %v298, %v302
    %v305 = vmul.f32 %v288, %v303
    %v306 = vmul.f32 %v290, %v304
    %v307 = vpack.c.bf16 %v306, %v305
    %308 = vrot.lane.b32.xlu0 %v97, 56
    %v309 = vpop.permute.xlu0 %308
    %v312 = vsel %vm151, %v307, 0
    %314 = vmatprep.subr.bf16.mxu0 0
    %315 = vmatpush1.bf16.msra.mxu0 %v309
    %316 = vmatprep.subr.bf16.mxu0 0
    %317 = vmatpush1.bf16.msra.mxu0 0
    %318 = vmatprep.subr.bf16.mxu0 0
    %319 = vmatpush1.bf16.msra.mxu0 0
    %320 = vmatprep.subr.bf16.mxu0 0
    %321 = vmatpush1.bf16.msra.mxu0 0
    %322 = vmatprep.subr.bf16.mxu0 0
    %323 = vmatpush1.bf16.msra.mxu0 0
    %324 = vmatprep.subr.bf16.mxu0 0
    %325 = vmatpush1.bf16.msra.mxu0 0
    %326 = vmatprep.subr.bf16.mxu0 0
    %327 = vmatpush1.bf16.msra.mxu0 0
    %328 = vmatprep.subr.bf16.mxu0 0
    %329 = vmatpush1.bf16.msra.mxu0 0
    %330 = vmatprep.subr.bf16.mxu0 0
    %331 = vmatpush1.bf16.msra.mxu0 0
    %332 = vmatprep.subr.bf16.mxu0 0
    %333 = vmatpush1.bf16.msra.mxu0 0
    %334 = vmatprep.subr.bf16.mxu0 0
    %335 = vmatpush1.bf16.msra.mxu0 0
    %336 = vmatprep.subr.bf16.mxu0 0
    %337 = vmatpush1.bf16.msra.mxu0 0
    %338 = vmatprep.subr.bf16.mxu0 0
    %339 = vmatpush1.bf16.msra.mxu0 0
    %340 = vmatprep.subr.bf16.mxu0 0
    %341 = vmatpush1.bf16.msra.mxu0 0
    %342 = vmatprep.subr.bf16.mxu0 0
    %343 = vmatpush1.bf16.msra.mxu0 0
    %344 = vmatprep.subr.bf16.mxu0 0
    %345 = vmatpush1.bf16.msra.mxu0 0
    %346 = vmatprep.mubr.bf16.mxu0 0
    %347 = vmatmul.mubr.bf16.gmra.mrb[0].mxu0 %v312
    %v348 = vpop.f32.mrb[0].mxu0
    %v349 = vadd.f32 0.0, %v348
    %v350 = vpop.f32.mrb[0].mxu0
    %v351 = vpop.f32.mrb[0].mxu0
    %v352 = vadd.f32 0.0, %v351
    %v353 = vpop.f32.mrb[0].mxu0
    %354 = vdwg.mxu0
    %355 = vrot.lane.b32.xlu0 %v97, 112
    %v356 = vpop.permute.xlu0 %355
    %357 = vrot.lane.b32.xlu0 %v97, 80
    %v358 = vpop.permute.xlu0 %357
    %v360 = vsel %vm103, %v356, 0
    %v363 = vsel %vm103, %v358, 0
    %365 = vmatprep.subr.bf16.mxu0 0
    %366 = vmatpush1.bf16.xpose.msra.mxu0 %v363
    %367 = vmatprep.subr.bf16.mxu0 0
    %368 = vmatpush1.bf16.xpose.msra.mxu0 0
    %369 = vmatprep.subr.bf16.mxu0 0
    %370 = vmatpush1.bf16.xpose.msra.mxu0 0
    %371 = vmatprep.subr.bf16.mxu0 0
    %372 = vmatpush1.bf16.xpose.msra.mxu0 0
    %373 = vmatprep.subr.bf16.mxu0 0
    %374 = vmatpush1.bf16.xpose.msra.mxu0 0
    %375 = vmatprep.subr.bf16.mxu0 0
    %376 = vmatpush1.bf16.xpose.msra.mxu0 0
    %377 = vmatprep.subr.bf16.mxu0 0
    %378 = vmatpush1.bf16.xpose.msra.mxu0 0
    %379 = vmatprep.subr.bf16.mxu0 0
    %380 = vmatpush1.bf16.xpose.msra.mxu0 0
    %381 = vmatprep.subr.bf16.mxu0 0
    %382 = vmatpush1.bf16.xpose.msra.mxu0 0
    %383 = vmatprep.subr.bf16.mxu0 0
    %384 = vmatpush1.bf16.xpose.msra.mxu0 0
    %385 = vmatprep.subr.bf16.mxu0 0
    %386 = vmatpush1.bf16.xpose.msra.mxu0 0
    %387 = vmatprep.subr.bf16.mxu0 0
    %388 = vmatpush1.bf16.xpose.msra.mxu0 0
    %389 = vmatprep.subr.bf16.mxu0 0
    %390 = vmatpush1.bf16.xpose.msra.mxu0 0
    %391 = vmatprep.subr.bf16.mxu0 0
    %392 = vmatpush1.bf16.xpose.msra.mxu0 0
    %393 = vmatprep.subr.bf16.mxu0 0
    %394 = vmatpush1.bf16.xpose.msra.mxu0 0
    %395 = vmatprep.subr.bf16.mxu0 0
    %396 = vmatpush1.bf16.xpose.msra.mxu0 0
    %397 = vmatprep.mubr.bf16.mxu0 0
    %398 = vmatmul.mubr.bf16.gmra.mrb[0].mxu0 %v360
    %v399 = vpop.f32.mrb[0].mxu0
    %v400 = vadd.f32 %v98, %v399
    %v401 = vpop.f32.mrb[0].mxu0
    %v402 = vpop.f32.mrb[0].mxu0
    %v403 = vadd.f32 %v99, %v402
    %v404 = vpop.f32.mrb[0].mxu0
    %405 = vdwg.mxu0
    %v406 = vsel %vm151, %v400, -inf
    %407 = vmax.xlane.f32.xlu0 %v406
    %v408 = vpop.xlane.xlu0 %407
    %v409 = vsel %vm151, %v403, -inf
    %410 = vmax.xlane.f32.xlu0 %v409
    %v411 = vpop.xlane.xlu0 %410
    %v412 = vsub.f32 %v400, %v408
    %v413 = vsub.f32 %v403, %v411
    %v414 = vmul.f32 %v412, 1.442695
    %v415 = vpow.pop %v414
    %v416 = vmul.f32 %v413, 1.442695
    %v417 = vpow.pop %v416
    %v418 = vsel %vm151, %v415, 0.0
    %419 = vadd.xlane.f32.xlu0 %v418
    %v420 = vpop.xlane.xlu0 %419
    %v421 = vsel %vm151, %v417, 0.0
    %422 = vadd.xlane.f32.xlu0 %v421
    %v423 = vpop.xlane.xlu0 %422
    %v424 = vrcp.pop %v420
    %v425 = vrcp.pop %v423
    %v426 = vmul.f32 %v420, %v424
    %v427 = vmul.f32 %v423, %v425
    %v428 = vsub.f32 2.0, %v426
    %v429 = vsub.f32 2.0, %v427
    %v430 = vmul.f32 %v424, %v428
    %v431 = vmul.f32 %v425, %v429
    %v432 = vmul.f32 %v415, %v430
    %v433 = vmul.f32 %v417, %v431
    %v434 = vpack.c.bf16 %v433, %v432
    %435 = vrot.lane.b32.xlu0 %v97, 48
    %v436 = vpop.permute.xlu0 %435
    %v439 = vsel %vm151, %v434, 0
    %441 = vmatprep.subr.bf16.mxu0 0
    %442 = vmatpush1.bf16.msra.mxu0 %v436
    %443 = vmatprep.subr.bf16.mxu0 0
    %444 = vmatpush1.bf16.msra.mxu0 0
    %445 = vmatprep.subr.bf16.mxu0 0
    %446 = vmatpush1.bf16.msra.mxu0 0
    %447 = vmatprep.subr.bf16.mxu0 0
    %448 = vmatpush1.bf16.msra.mxu0 0
    %449 = vmatprep.subr.bf16.mxu0 0
    %450 = vmatpush1.bf16.msra.mxu0 0
    %451 = vmatprep.subr.bf16.mxu0 0
    %452 = vmatpush1.bf16.msra.mxu0 0
    %453 = vmatprep.subr.bf16.mxu0 0
    %454 = vmatpush1.bf16.msra.mxu0 0
    %455 = vmatprep.subr.bf16.mxu0 0
    %456 = vmatpush1.bf16.msra.mxu0 0
    %457 = vmatprep.subr.bf16.mxu0 0
    %458 = vmatpush1.bf16.msra.mxu0 0
    %459 = vmatprep.subr.bf16.mxu0 0
    %460 = vmatpush1.bf16.msra.mxu0 0
    %461 = vmatprep.subr.bf16.mxu0 0
    %462 = vmatpush1.bf16.msra.mxu0 0
    %463 = vmatprep.subr.bf16.mxu0 0
    %464 = vmatpush1.bf16.msra.mxu0 0
    %465 = vmatprep.subr.bf16.mxu0 0
    %466 = vmatpush1.bf16.msra.mxu0 0
    %467 = vmatprep.subr.bf16.mxu0 0
    %468 = vmatpush1.bf16.msra.mxu0 0
    %469 = vmatprep.subr.bf16.mxu0 0
    %470 = vmatpush1.bf16.msra.mxu0 0
    %471 = vmatprep.subr.bf16.mxu0 0
    %472 = vmatpush1.bf16.msra.mxu0 0
    %473 = vmatprep.mubr.bf16.mxu0 0
    %474 = vmatmul.mubr.bf16.gmra.mrb[0].mxu0 %v439
    %v475 = vpop.f32.mrb[0].mxu0
    %v476 = vadd.f32 0.0, %v475
    %v477 = vpop.f32.mrb[0].mxu0
    %v478 = vpop.f32.mrb[0].mxu0
    %v479 = vadd.f32 0.0, %v478
    %v480 = vpop.f32.mrb[0].mxu0
    %481 = vdwg.mxu0
    %482 = vrot.lane.b32.xlu0 %v97, 104
    %v483 = vpop.permute.xlu0 %482
    %484 = vrot.lane.b32.xlu0 %v97, 72
    %v485 = vpop.permute.xlu0 %484
    %v487 = vsel %vm103, %v483, 0
    %v490 = vsel %vm103, %v485, 0
    %492 = vmatprep.subr.bf16.mxu0 0
    %493 = vmatpush1.bf16.xpose.msra.mxu0 %v490
    %494 = vmatprep.subr.bf16.mxu0 0
    %495 = vmatpush1.bf16.xpose.msra.mxu0 0
    %496 = vmatprep.subr.bf16.mxu0 0
    %497 = vmatpush1.bf16.xpose.msra.mxu0 0
    %498 = vmatprep.subr.bf16.mxu0 0
    %499 = vmatpush1.bf16.xpose.msra.mxu0 0
    %500 = vmatprep.subr.bf16.mxu0 0
    %501 = vmatpush1.bf16.xpose.msra.mxu0 0
    %502 = vmatprep.subr.bf16.mxu0 0
    %503 = vmatpush1.bf16.xpose.msra.mxu0 0
    %504 = vmatprep.subr.bf16.mxu0 0
    %505 = vmatpush1.bf16.xpose.msra.mxu0 0
    %506 = vmatprep.subr.bf16.mxu0 0
    %507 = vmatpush1.bf16.xpose.msra.mxu0 0
    %508 = vmatprep.subr.bf16.mxu0 0
    %509 = vmatpush1.bf16.xpose.msra.mxu0 0
    %510 = vmatprep.subr.bf16.mxu0 0
    %511 = vmatpush1.bf16.xpose.msra.mxu0 0
    %512 = vmatprep.subr.bf16.mxu0 0
    %513 = vmatpush1.bf16.xpose.msra.mxu0 0
    %514 = vmatprep.subr.bf16.mxu0 0
    %515 = vmatpush1.bf16.xpose.msra.mxu0 0
    %516 = vmatprep.subr.bf16.mxu0 0
    %517 = vmatpush1.bf16.xpose.msra.mxu0 0
    %518 = vmatprep.subr.bf16.mxu0 0
    %519 = vmatpush1.bf16.xpose.msra.mxu0 0
    %520 = vmatprep.subr.bf16.mxu0 0
    %521 = vmatpush1.bf16.xpose.msra.mxu0 0
    %522 = vmatprep.subr.bf16.mxu0 0
    %523 = vmatpush1.bf16.xpose.msra.mxu0 0
    %524 = vmatprep.mubr.bf16.mxu0 0
    %525 = vmatmul.mubr.bf16.gmra.mrb[0].mxu0 %v487
    %v526 = vpop.f32.mrb[0].mxu0
    %v527 = vadd.f32 %v98, %v526
    %v528 = vpop.f32.mrb[0].mxu0
    %v529 = vpop.f32.mrb[0].mxu0
    %v530 = vadd.f32 %v99, %v529
    %v531 = vpop.f32.mrb[0].mxu0
    %532 = vdwg.mxu0
    %v533 = vsel %vm151, %v527, -inf
    %534 = vmax.xlane.f32.xlu0 %v533
    %v535 = vpop.xlane.xlu0 %534
    %v536 = vsel %vm151, %v530, -inf
    %537 = vmax.xlane.f32.xlu0 %v536
    %v538 = vpop.xlane.xlu0 %537
    %v539 = vsub.f32 %v527, %v535
    %v540 = vsub.f32 %v530, %v538
    %v541 = vmul.f32 %v539, 1.442695
    %v542 = vpow.pop %v541
    %v543 = vmul.f32 %v540, 1.442695
    %v544 = vpow.pop %v543
    %v545 = vsel %vm151, %v542, 0.0
    %546 = vadd.xlane.f32.xlu0 %v545
    %v547 = vpop.xlane.xlu0 %546
    %v548 = vsel %vm151, %v544, 0.0
    %549 = vadd.xlane.f32.xlu0 %v548
    %v550 = vpop.xlane.xlu0 %549
    %v551 = vrcp.pop %v547
    %v552 = vrcp.pop %v550
    %v553 = vmul.f32 %v547, %v551
    %v554 = vmul.f32 %v550, %v552
    %v555 = vsub.f32 2.0, %v553
    %v556 = vsub.f32 2.0, %v554
    %v557 = vmul.f32 %v551, %v555
    %v558 = vmul.f32 %v552, %v556
    %v559 = vmul.f32 %v542, %v557
    %v560 = vmul.f32 %v544, %v558
    %v561 = vpack.c.bf16 %v560, %v559
    %562 = vrot.lane.b32.xlu0 %v97, 40
    %v563 = vpop.permute.xlu0 %562
    %v566 = vsel %vm151, %v561, 0
    %568 = vmatprep.subr.bf16.mxu0 0
    %569 = vmatpush1.bf16.msra.mxu0 %v563
    %570 = vmatprep.subr.bf16.mxu0 0
    %571 = vmatpush1.bf16.msra.mxu0 0
    %572 = vmatprep.subr.bf16.mxu0 0
    %573 = vmatpush1.bf16.msra.mxu0 0
    %574 = vmatprep.subr.bf16.mxu0 0
    %575 = vmatpush1.bf16.msra.mxu0 0
    %576 = vmatprep.subr.bf16.mxu0 0
    %577 = vmatpush1.bf16.msra.mxu0 0
    %578 = vmatprep.subr.bf16.mxu0 0
    %579 = vmatpush1.bf16.msra.mxu0 0
    %580 = vmatprep.subr.bf16.mxu0 0
    %581 = vmatpush1.bf16.msra.mxu0 0
    %582 = vmatprep.subr.bf16.mxu0 0
    %583 = vmatpush1.bf16.msra.mxu0 0
    %584 = vmatprep.subr.bf16.mxu0 0
    %585 = vmatpush1.bf16.msra.mxu0 0
    %586 = vmatprep.subr.bf16.mxu0 0
    %587 = vmatpush1.bf16.msra.mxu0 0
    %588 = vmatprep.subr.bf16.mxu0 0
    %589 = vmatpush1.bf16.msra.mxu0 0
    %590 = vmatprep.subr.bf16.mxu0 0
    %591 = vmatpush1.bf16.msra.mxu0 0
    %592 = vmatprep.subr.bf16.mxu0 0
    %593 = vmatpush1.bf16.msra.mxu0 0
    %594 = vmatprep.subr.bf16.mxu0 0
    %595 = vmatpush1.bf16.msra.mxu0 0
    %596 = vmatprep.subr.bf16.mxu0 0
    %597 = vmatpush1.bf16.msra.mxu0 0
    %598 = vmatprep.subr.bf16.mxu0 0
    %599 = vmatpush1.bf16.msra.mxu0 0
    %600 = vmatprep.mubr.bf16.mxu0 0
    %601 = vmatmul.mubr.bf16.gmra.mrb[0].mxu0 %v566
    %v602 = vpop.f32.mrb[0].mxu0
    %v603 = vadd.f32 0.0, %v602
    %v604 = vpop.f32.mrb[0].mxu0
    %v605 = vpop.f32.mrb[0].mxu0
    %v606 = vadd.f32 0.0, %v605
    %v607 = vpop.f32.mrb[0].mxu0
    %608 = vdwg.mxu0
    %611 = vrot.lane.b32.xlu0 %v349, 8
    %v612 = vpop.permute.xlu0 %611
    %613 = vrot.lane.b32.xlu0 %v352, 8
    %v614 = vpop.permute.xlu0 %613
    %619 = vrot.lane.b32.xlu0 %v476, 16
    %v620 = vpop.permute.xlu0 %619
    %621 = vrot.lane.b32.xlu0 %v479, 16
    %v622 = vpop.permute.xlu0 %621
    %627 = vrot.lane.b32.xlu0 %v603, 24
    %v628 = vpop.permute.xlu0 %627
    %629 = vrot.lane.b32.xlu0 %v606, 24
    %v630 = vpop.permute.xlu0 %629
    %v633 = vsel %vm103, %v222, %v612
    %v634 = vsel %vm103, %v225, %v614
    %v635 = vsel %vm151, %v633, %v620
    %v636 = vsel %vm151, %v634, %v622
    %vm637 = vcmask 195584
    %v638 = vsel %vm637, %v635, %v628
    %v639 = vsel %vm637, %v636, %v630
    %v640 = vpack.c.bf16 %v639, %v638
    %v641 = vld [vmem:[%s3] sm:$0xf]
    %v642 = vld [vmem:[%s3 + $0x4] sm:$0xf]
    %v643 = vld [vmem:[%s3 + $0x8] sm:$0xf]
    %v644 = vld [vmem:[%s3 + $0xc] sm:$0xf]
    %v645 = vlaneseq
    %v646 = vshrl.u32 %v645, 7
    %v647 = vsub.s32 1, %v646
    %v648 = vrot.slane %v30, %v647
    %v653 = vunpack.c.l.b16 %v641
    %v654 = vunpack.c.l.b16 %v642
    %v655 = vunpack.c.l.b16 %v643
    %v656 = vunpack.c.l.b16 %v644
    %v657 = vpack.c.b16 %v654, %v653
    %v658 = vpack.c.b16 %v656, %v655
    %v662 = vsel %vm52, %v640, 0
    %664 = vmatprep.subr.bf16.mxu0 0
    %665 = vmatpush1.bf16.msra.mxu0 %v657
    %666 = vmatprep.subr.bf16.mxu0 0
    %667 = vmatpush1.bf16.msra.mxu0 %v658
    %668 = vmatprep.subr.bf16.mxu0 0
    %669 = vmatpush1.bf16.msra.mxu0 0
    %670 = vmatprep.subr.bf16.mxu0 0
    %671 = vmatpush1.bf16.msra.mxu0 0
    %672 = vmatprep.subr.bf16.mxu0 0
    %673 = vmatpush1.bf16.msra.mxu0 0
    %674 = vmatprep.subr.bf16.mxu0 0
    %675 = vmatpush1.bf16.msra.mxu0 0
    %676 = vmatprep.subr.bf16.mxu0 0
    %677 = vmatpush1.bf16.msra.mxu0 0
    %678 = vmatprep.subr.bf16.mxu0 0
    %679 = vmatpush1.bf16.msra.mxu0 0
    %680 = vmatprep.subr.bf16.mxu0 0
    %681 = vmatpush1.bf16.msra.mxu0 0
    %682 = vmatprep.subr.bf16.mxu0 0
    %683 = vmatpush1.bf16.msra.mxu0 0
    %684 = vmatprep.subr.bf16.mxu0 0
    %685 = vmatpush1.bf16.msra.mxu0 0
    %686 = vmatprep.subr.bf16.mxu0 0
    %687 = vmatpush1.bf16.msra.mxu0 0
    %688 = vmatprep.subr.bf16.mxu0 0
    %689 = vmatpush1.bf16.msra.mxu0 0
    %690 = vmatprep.subr.bf16.mxu0 0
    %691 = vmatpush1.bf16.msra.mxu0 0
    %692 = vmatprep.subr.bf16.mxu0 0
    %693 = vmatpush1.bf16.msra.mxu0 0
    %694 = vmatprep.subr.bf16.mxu0 0
    %695 = vmatpush1.bf16.msra.mxu0 0
    %696 = vmatprep.mubr.bf16.mxu0 0
    %697 = vmatmul.mubr.bf16.gmra.mrb[0].mxu0 %v662
    %v698 = vpop.f32.mrb[0].mxu0
    %v699 = vadd.f32 %v648, %v698
    %v700 = vpop.f32.mrb[0].mxu0
    %v701 = vpop.f32.mrb[0].mxu0
    %v702 = vadd.f32 %v648, %v701
    %v703 = vpop.f32.mrb[0].mxu0
    %704 = vdwg.mxu0
    %v705 = vadd.f32 %v699, %v28
    %v706 = vadd.f32 %v702, %v29
    %v707 = vsel %vm52, %v705, 0.0
    %708 = vadd.xlane.f32.xlu0 %v707
    %v709 = vpop.xlane.xlu0 %708
    %v710 = vsel %vm52, %v706, 0.0
    %711 = vadd.xlane.f32.xlu0 %v710
    %v712 = vpop.xlane.xlu0 %711
    %v713 = vrcp.pop 32.0
    %v714 = vmul.f32 %v709, %v713
    %v715 = vmul.f32 %v712, %v713
    %v716 = vsub.f32 %v705, %v714
    %v717 = vsub.f32 %v706, %v715
    %v718 = vmul.f32 %v716, %v716
    %v719 = vmul.f32 %v717, %v717
    %v720 = vsel %vm52, %v718, 0.0
    %721 = vadd.xlane.f32.xlu0 %v720
    %v722 = vpop.xlane.xlu0 %721
    %v723 = vsel %vm52, %v719, 0.0
    %724 = vadd.xlane.f32.xlu0 %v723
    %v725 = vpop.xlane.xlu0 %724
    %v726 = vmul.f32 %v722, %v713
    %v727 = vmul.f32 %v725, %v713
    %v728 = vadd.f32 %v726, 1e-12
    %v729 = vadd.f32 %v727, 1e-12
    %v730 = vrsqrt.pop %v728
    %v731 = vrsqrt.pop %v729
    %v732 = vmul.f32 %v716, %v730
    %v733 = vmul.f32 %v717, %v731
    %v734 = vlaneseq
    %v735 = vshrl.u32 %v734, 7
    %v736 = vsub.s32 2, %v735
    %v737 = vrot.slane %v30, %v736
    %v738 = vmul.f32 %v732, %v737
    %v739 = vmul.f32 %v733, %v737
    %v740 = vlaneseq
    %v741 = vshrl.u32 %v740, 7
    %v742 = vsub.s32 3, %v741
    %v743 = vrot.slane %v30, %v742
    %v744 = vadd.f32 %v738, %v743
    %v745 = vadd.f32 %v739, %v743
    %v746 = vpack.c.bf16 %v745, %v744
    %v747 = vld [vmem:[%s4] sm:$0xf]
    %v748 = vld [vmem:[%s4 + $0x4] sm:$0xf]
    %v749 = vld [vmem:[%s4 + $0x8] sm:$0xf]
    %v750 = vld [vmem:[%s4 + $0xc] sm:$0xf]
    %v751 = vlaneseq
    %v752 = vshrl.u32 %v751, 7
    %v753 = vsub.s32 4, %v752
    %v754 = vrot.slane %v30, %v753
    %v759 = vunpack.c.l.b16 %v747
    %v760 = vunpack.c.l.b16 %v748
    %v761 = vunpack.c.l.b16 %v749
    %v762 = vunpack.c.l.b16 %v750
    %v763 = vpack.c.b16 %v760, %v759
    %v764 = vpack.c.b16 %v762, %v761
    %v768 = vsel %vm52, %v746, 0
    %770 = vmatprep.subr.bf16.mxu0 0
    %771 = vmatpush1.bf16.msra.mxu0 %v763
    %772 = vmatprep.subr.bf16.mxu0 0
    %773 = vmatpush1.bf16.msra.mxu0 %v764
    %774 = vmatprep.subr.bf16.mxu0 0
    %775 = vmatpush1.bf16.msra.mxu0 0
    %776 = vmatprep.subr.bf16.mxu0 0
    %777 = vmatpush1.bf16.msra.mxu0 0
    %778 = vmatprep.subr.bf16.mxu0 0
    %779 = vmatpush1.bf16.msra.mxu0 0
    %780 = vmatprep.subr.bf16.mxu0 0
    %781 = vmatpush1.bf16.msra.mxu0 0
    %782 = vmatprep.subr.bf16.mxu0 0
    %783 = vmatpush1.bf16.msra.mxu0 0
    %784 = vmatprep.subr.bf16.mxu0 0
    %785 = vmatpush1.bf16.msra.mxu0 0
    %786 = vmatprep.subr.bf16.mxu0 0
    %787 = vmatpush1.bf16.msra.mxu0 0
    %788 = vmatprep.subr.bf16.mxu0 0
    %789 = vmatpush1.bf16.msra.mxu0 0
    %790 = vmatprep.subr.bf16.mxu0 0
    %791 = vmatpush1.bf16.msra.mxu0 0
    %792 = vmatprep.subr.bf16.mxu0 0
    %793 = vmatpush1.bf16.msra.mxu0 0
    %794 = vmatprep.subr.bf16.mxu0 0
    %795 = vmatpush1.bf16.msra.mxu0 0
    %796 = vmatprep.subr.bf16.mxu0 0
    %797 = vmatpush1.bf16.msra.mxu0 0
    %798 = vmatprep.subr.bf16.mxu0 0
    %799 = vmatpush1.bf16.msra.mxu0 0
    %800 = vmatprep.subr.bf16.mxu0 0
    %801 = vmatpush1.bf16.msra.mxu0 0
    %802 = vmatprep.mubr.bf16.mxu0 0
    %803 = vmatmul.mubr.bf16.gmra.mrb[0].mxu0 %v768
    %v804 = vpop.f32.mrb[0].mxu0
    %v805 = vadd.f32 %v754, %v804
    %v806 = vpop.f32.mrb[0].mxu0
    %v807 = vpop.f32.mrb[0].mxu0
    %v808 = vadd.f32 %v754, %v807
    %v809 = vpop.f32.mrb[0].mxu0
    %810 = vdwg.mxu0
    %v811 = vmul.f32 %v805, 0.5
    %v812 = vmul.f32 %v808, 0.5
    %v813 = vrcp.pop 1.4142135
    %v814 = vmul.f32 %v805, %v813
    %v815 = vmul.f32 %v808, %v813
    %v816 = verf.f32.pop %v814
    %v817 = verf.f32.pop %v815
    %v818 = vadd.f32 %v816, 1.0
    %v819 = vadd.f32 %v817, 1.0
    %v820 = vmul.f32 %v811, %v818
    %v821 = vmul.f32 %v812, %v819
    %v822 = vpack.c.bf16 %v821, %v820
    %v823 = vld [vmem:[%s5] sm:$0xf]
    %v824 = vld [vmem:[%s5 + $0x4] sm:$0xf]
    %v825 = vld [vmem:[%s5 + $0x8] sm:$0xf]
    %v826 = vld [vmem:[%s5 + $0xc] sm:$0xf]
    %v827 = vld [vmem:[%s5 + $0x10] sm:$0xf]
    %v828 = vld [vmem:[%s5 + $0x14] sm:$0xf]
    %v829 = vld [vmem:[%s5 + $0x18] sm:$0xf]
    %v830 = vld [vmem:[%s5 + $0x1c] sm:$0xf]
    %v831 = vlaneseq
    %v832 = vshrl.u32 %v831, 7
    %v833 = vsub.s32 5, %v832
    %v834 = vrot.slane %v30, %v833
    %v843 = vunpack.c.l.b16 %v823
    %v844 = vunpack.c.l.b16 %v824
    %v845 = vunpack.c.l.b16 %v825
    %v846 = vunpack.c.l.b16 %v826
    %v847 = vunpack.c.l.b16 %v827
    %v848 = vunpack.c.l.b16 %v828
    %v849 = vunpack.c.l.b16 %v829
    %v850 = vunpack.c.l.b16 %v830
    %v851 = vpack.c.b16 %v844, %v843
    %v852 = vpack.c.b16 %v846, %v845
    %v853 = vpack.c.b16 %v848, %v847
    %v854 = vpack.c.b16 %v850, %v849
    %vm859 = vcmask 523264
    %v861 = vsel %vm859, %v822, 0
    %863 = vmatprep.subr.bf16.mxu0 0
    %864 = vmatpush1.bf16.msra.mxu0 %v851
    %865 = vmatprep.subr.bf16.mxu0 0
    %866 = vmatpush1.bf16.msra.mxu0 %v852
    %867 = vmatprep.subr.bf16.mxu0 0
    %868 = vmatpush1.bf16.msra.mxu0 %v853
    %869 = vmatprep.subr.bf16.mxu0 0
    %870 = vmatpush1.bf16.msra.mxu0 %v854
    %871 = vmatprep.subr.bf16.mxu0 0
    %872 = vmatpush1.bf16.msra.mxu0 0
    %873 = vmatprep.subr.bf16.mxu0 0
    %874 = vmatpush1.bf16.msra.mxu0 0
    %875 = vmatprep.subr.bf16.mxu0 0
    %876 = vmatpush1.bf16.msra.mxu0 0
    %877 = vmatprep.subr.bf16.mxu0 0
    %878 = vmatpush1.bf16.msra.mxu0 0
    %879 = vmatprep.subr.bf16.mxu0 0
    %880 = vmatpush1.bf16.msra.mxu0 0
    %881 = vmatprep.subr.bf16.mxu0 0
    %882 = vmatpush1.bf16.msra.mxu0 0
    %883 = vmatprep.subr.bf16.mxu0 0
    %884 = vmatpush1.bf16.msra.mxu0 0
    %885 = vmatprep.subr.bf16.mxu0 0
    %886 = vmatpush1.bf16.msra.mxu0 0
    %887 = vmatprep.subr.bf16.mxu0 0
    %888 = vmatpush1.bf16.msra.mxu0 0
    %889 = vmatprep.subr.bf16.mxu0 0
    %890 = vmatpush1.bf16.msra.mxu0 0
    %891 = vmatprep.subr.bf16.mxu0 0
    %892 = vmatpush1.bf16.msra.mxu0 0
    %893 = vmatprep.subr.bf16.mxu0 0
    %894 = vmatpush1.bf16.msra.mxu0 0
    %895 = vmatprep.mubr.bf16.mxu0 0
    %896 = vmatmul.mubr.bf16.gmra.mrb[0].mxu0 %v861
    %v897 = vpop.f32.mrb[0].mxu0
    %v898 = vadd.f32 %v834, %v897
    %v899 = vpop.f32.mrb[0].mxu0
    %v900 = vpop.f32.mrb[0].mxu0
    %v901 = vadd.f32 %v834, %v900
    %v902 = vpop.f32.mrb[0].mxu0
    %903 = vdwg.mxu0
    %v904 = vadd.f32 %v898, %v744
    %v905 = vadd.f32 %v901, %v745
    %v906 = vsel %vm52, %v904, 0.0
    %907 = vadd.xlane.f32.xlu0 %v906
    %v908 = vpop.xlane.xlu0 %907
    %v909 = vsel %vm52, %v905, 0.0
    %910 = vadd.xlane.f32.xlu0 %v909
    %v911 = vpop.xlane.xlu0 %910
    %v912 = vmul.f32 %v908, %v713
    %v913 = vmul.f32 %v911, %v713
    %v914 = vsub.f32 %v904, %v912
    %v915 = vsub.f32 %v905, %v913
    %v916 = vmul.f32 %v914, %v914
    %v917 = vmul.f32 %v915, %v915
    %v918 = vsel %vm52, %v916, 0.0
    %919 = vadd.xlane.f32.xlu0 %v918
    %v920 = vpop.xlane.xlu0 %919
    %v921 = vsel %vm52, %v917, 0.0
    %922 = vadd.xlane.f32.xlu0 %v921
    %v923 = vpop.xlane.xlu0 %922
    %v924 = vmul.f32 %v920, %v713
    %v925 = vmul.f32 %v923, %v713
    %v926 = vadd.f32 %v924, 1e-12
    %v927 = vadd.f32 %v925, 1e-12
    %v928 = vrsqrt.pop %v926
    %v929 = vrsqrt.pop %v927
    %v930 = vmul.f32 %v914, %v928
    %v931 = vmul.f32 %v915, %v929
    %v932 = vlaneseq
    %v933 = vshrl.u32 %v932, 7
    %v934 = vsub.s32 6, %v933
    %v935 = vrot.slane %v30, %v934
    %v936 = vmul.f32 %v930, %v935
    %v937 = vmul.f32 %v931, %v935
    %v938 = vlaneseq
    %v939 = vshrl.u32 %v938, 7
    %v940 = vsub.s32 7, %v939
    %v941 = vrot.slane %v30, %v940
    %v942 = vadd.f32 %v936, %v941
    %v943 = vadd.f32 %v937, %v941
    %944 = vst.msk [vmem:[#allocation2] sm:$0xff] %vm52, %v942
    %945 = vst.msk [vmem:[#allocation2 + $0x8] sm:$0xff] %vm52, %v943
    // Predicated region
    $region30: #{bert_layer_pallas.1} parent=1 // pred_check
      _
    $region31: #{bert_layer_pallas.1} parent=1 // pred_check_branch
      %947 = sbr.rel (0) target = $region33
    $region32: #{bert_layer_pallas.1} parent=1 // pred_region
      %s949 = ssub.s32 256, 256
      %950 = vsyncadd [#allocation3], %s949
      %s951 = sshll.u32 [#allocation2], 4
      %s952 = int_to_ptr.vmem [resolvable:$true] %s951
      %957 = dma.vmem_to_hbm [thread:$0]  %s952, 256, %s7, [#allocation3], 128, 128, 8
    $region33: #{bert_layer_pallas.1} parent=1 // pred_fallthru
      _
    // Predicated region
    $region34: #{bert_layer_pallas.1} parent=1 // pred_check
      _
    $region35: #{bert_layer_pallas.1} parent=1 // pred_check_branch
      %959 = sbr.rel (0) target = $region37
    $region36: #{bert_layer_pallas.1} parent=1 // pred_region
      %960 = dma.done [#allocation3], 256
    $region37: #{bert_layer_pallas.1} parent=1 // pred_fallthru
      _
    %961 = vsyncpa [#allocation3], 1

</llo_original>
